<compile_context>
chip_gen: v5e
topology: v5e:2x2
jax: 0.10.0
libtpu: 0.0.40
codegen_flags: <defaults>
</compile_context>

<pallas_src>
import functools

import jax
import jax.numpy as jnp
from jax.experimental import pallas as pl
from jax.experimental.pallas import tpu as pltpu

_LANES = 128
_VMEM_LIMIT = 48 * 1024 * 1024   # safe on v7x (64 MiB phys) and below


def _round_up(x, m):
    return ((x + m - 1) // m) * m


def _pick_tm(m, tm_max=512):
    # Single large row tile when M is small (one TC on v5e/v6e); multiple of 8.
    return max(8, min(tm_max, _round_up(m, 8)))


# ----------------------------- Pallas kernels ------------------------------

def _mm_bn_kernel(x_ref, w_ref, s_ref, b_ref, o_ref, *, relu):
    # (tm, K) @ (K, Cout) on the MXU (bf16 in, f32 acc), folded-BN epilogue.
    # NOTE: partial last row blocks feed padded (undefined) rows into the dot;
    # rows are independent and Pallas masks the partial-block store, so OK.
    acc = jnp.dot(x_ref[...], w_ref[...], preferred_element_type=jnp.float32)
    out = acc * s_ref[...] + b_ref[...]
    if relu:
        out = jnp.maximum(out, 0.0)
    o_ref[...] = out.astype(o_ref.dtype)


def _mm_bn_add_kernel(x_ref, w_ref, s_ref, b_ref, r_ref, o_ref):
    # conv3 + bn3 + identity residual + ReLU.  (Residual added in bf16: a
    # deliberate, tolerance-covered precision trade vs. the f32 reference.)
    acc = jnp.dot(x_ref[...], w_ref[...], preferred_element_type=jnp.float32)
    out = acc * s_ref[...] + b_ref[...] + r_ref[...].astype(jnp.float32)
    o_ref[...] = jnp.maximum(out, 0.0).astype(o_ref.dtype)


def _mm_bn_proj_kernel(x_ref, w_ref, s_ref, b_ref,
                       px_ref, pw_ref, ps_ref, pb_ref, o_ref, sub_ref,
                       *, stride, H, W):
    # conv3 + bn3 fused with the projection-shortcut 1x1 conv + bnsc + ReLU.
    # The shortcut's spatial subsample (stride) is done in-kernel via strided
    # sublane copies into a VMEM scratch (no XLA strided-slice round trip).
    Ho = (H - 1) // stride + 1
    Wo = (W - 1) // stride + 1
    if stride == 1:
        sub = px_ref[...]                       # no subsample needed
    else:
        for ho in range(Ho):
            sub_ref[pl.ds(ho * Wo, Wo), :] = px_ref[
                pl.ds(ho * stride * W, Wo, stride=stride), :]
        sub = sub_ref[...]
    main = jnp.dot(x_ref[...], w_ref[...], preferred_element_type=jnp.float32)
    main = main * s_ref[...] + b_ref[...]
    res = jnp.dot(sub, pw_ref[...], preferred_element_type=jnp.float32)
    res = res * ps_ref[...] + pb_ref[...]
    o_ref[...] = jnp.maximum(main + res, 0.0).astype(o_ref.dtype)


def _conv3x3_bn_kernel(x_ref, w_ref, s_ref, b_ref, o_ref, xpad_ref, lhs_ref,
                       *, stride, H, W, C1):
    # Whole-image direct 3x3 conv (pad=1) for one batch element.
    #   x_ref:    (H*W, C1)        flattened unpadded image (bf16)
    #   w_ref:    (9*C1, C2)       taps stacked in (kh, kw) order
    #   xpad_ref: ((H+2)*(W+2), C1) VMEM scratch — zero halo + image interior
    #   lhs_ref:  (Ho*Wo, 9*C1)    VMEM scratch — im2col LHS
    Wp = W + 2
    Ho = (H - 1) // stride + 1
    Wo = (W - 1) // stride + 1

    # 1) zero the padded-image scratch (halo), copy the image into its
    #    interior (VMEM<->VMEM; replaces the old XLA jnp.pad HBM round trip).
    xpad_ref[...] = jnp.zeros_like(xpad_ref)
    for r in range(H):
        xpad_ref[pl.ds((r + 1) * Wp + 1, W), :] = x_ref[pl.ds(r * W, W), :]

    # 2) build the (Ho*Wo, 9*C1) im2col LHS: for each output row, 9 tap slices
    #    of the padded image (strided sublane loads when stride > 1).
    #    TODO(synk): stride=2 could deinterleave even/odd columns once instead
    #    of per-tap strided loads.
    for ho in range(Ho):
        for kh in range(3):
            row_base = (ho * stride + kh) * Wp
            for kw in range(3):
                tap = kh * 3 + kw
                if stride == 1:
                    xs = xpad_ref[pl.ds(row_base + kw, Wo), :]
                else:
                    xs = xpad_ref[pl.ds(row_base + kw, Wo, stride=stride), :]
                lhs_ref[pl.ds(ho * Wo, Wo), tap * C1:(tap + 1) * C1] = xs

    # 3) one large-M MXU matmul (M = Ho*Wo, not Wo) + folded BN + ReLU,
    #    lane-dense bf16 store.
    acc = jnp.dot(lhs_ref[...], w_ref[...], preferred_element_type=jnp.float32)
    out = acc * s_ref[...] + b_ref[...]
    o_ref[...] = jnp.maximum(out, 0.0).astype(o_ref.dtype)


# ---------------------------- pallas_call wrappers --------------------------

def conv1x1_bn(x2d, w, scale, shift, *, relu=True, residual=None,
               out_dtype=jnp.bfloat16, tm_max=512):
    """act((x2d @ w) * scale + shift [+ residual]).

    x2d:         (M, K)      pixels x channels (bf16)
    w:           (K, Cout)   Cout padded to a multiple of 128 lanes (bf16)
    scale,shift: (1, Cout)   folded BN (f32)
    residual:    (M, Cout)   identity-shortcut tensor (bf16), optional
    """
    M, K = x2d.shape
    Cout = w.shape[1]
    tm = _pick_tm(M, tm_max)

    args = [x2d, w, scale, shift]
    in_specs = [
        pl.BlockSpec((tm, K), lambda i: (i, 0)),
        pl.BlockSpec((K, Cout), lambda i: (0, 0)),
        pl.BlockSpec((1, Cout), lambda i: (0, 0)),
        pl.BlockSpec((1, Cout), lambda i: (0, 0)),
    ]
    flops = 2 * M * K * Cout
    nbytes = (x2d.size * x2d.dtype.itemsize + w.size * w.dtype.itemsize
              + M * Cout * jnp.dtype(out_dtype).itemsize + 8 * Cout)

    if residual is not None:
        args.append(residual)
        in_specs.append(pl.BlockSpec((tm, Cout), lambda i: (i, 0)))
        kernel = _mm_bn_add_kernel
        nbytes += residual.size * residual.dtype.itemsize
    else:
        kernel = functools.partial(_mm_bn_kernel, relu=relu)

    return pl.pallas_call(
        kernel,
        out_shape=jax.ShapeDtypeStruct((M, Cout), out_dtype),
        grid=(pl.cdiv(M, tm),),
        in_specs=in_specs,
        out_specs=pl.BlockSpec((tm, Cout), lambda i: (i, 0)),
        compiler_params=pltpu.CompilerParams(
            dimension_semantics=("parallel",),
            vmem_limit_bytes=_VMEM_LIMIT),
        cost_estimate=pl.CostEstimate(flops=flops, transcendentals=0,
                                      bytes_accessed=nbytes),
    )(*args)


def conv3x3_bn(x_flat, w_mat, scale, shift, *, stride, height, width,
               out_dtype=jnp.bfloat16):
    """3x3 conv (pad=1, stride) + folded BN + ReLU, one grid step per image.

    x_flat: (N, H*W, C1)  bf16, C1 padded to 128 lanes
    w_mat:  (9*C1, C2)    taps stacked in (kh, kw) order, bf16
    returns (N, Ho*Wo, C2) bf16
    """
    N, HW, C1 = x_flat.shape
    C2 = w_mat.shape[1]
    H, W = height, width
    assert HW == H * W
    Hp, Wp = H + 2, W + 2
    Ho = (H - 1) // stride + 1
    Wo = (W - 1) // stride + 1

    kernel = functools.partial(_conv3x3_bn_kernel, stride=stride,
                               H=H, W=W, C1=C1)
    flops = 2 * N * Ho * Wo * 9 * C1 * C2
    nbytes = (x_flat.size * x_flat.dtype.itemsize
              + w_mat.size * w_mat.dtype.itemsize
              + N * Ho * Wo * C2 * jnp.dtype(out_dtype).itemsize + 8 * C2)

    return pl.pallas_call(
        kernel,
        out_shape=jax.ShapeDtypeStruct((N, Ho * Wo, C2), out_dtype),
        grid=(N,),
        in_specs=[
            pl.BlockSpec((None, HW, C1), lambda n: (n, 0, 0)),
            pl.BlockSpec((9 * C1, C2), lambda n: (0, 0)),
            pl.BlockSpec((1, C2), lambda n: (0, 0)),
            pl.BlockSpec((1, C2), lambda n: (0, 0)),
        ],
        out_specs=pl.BlockSpec((None, Ho * Wo, C2), lambda n: (n, 0, 0)),
        scratch_shapes=[pltpu.VMEM((Hp * Wp, C1), x_flat.dtype),
                        pltpu.VMEM((Ho * Wo, 9 * C1), x_flat.dtype)],
        compiler_params=pltpu.CompilerParams(
            dimension_semantics=("parallel",),
            vmem_limit_bytes=_VMEM_LIMIT),
        cost_estimate=pl.CostEstimate(flops=flops, transcendentals=0,
                                      bytes_accessed=nbytes),
    )(x_flat, w_mat, scale, shift)


def conv3_proj_fused(o2, x_flat, w3, s3, b3, wsc, ssc, bsc, *,
                     stride, height, width, out_dtype=jnp.bfloat16):
    """conv3 (1x1) + bn3 fused with projection shortcut (1x1, stride) + ReLU.

    o2:     (N, Ho*Wo, C2)  conv2 output, bf16
    x_flat: (N, H*W, Cin)   block input (shortcut source), bf16
    returns (N, Ho*Wo, C3)  bf16
    """
    N, M2, C2 = o2.shape
    _, MX, Cin = x_flat.shape
    C3 = w3.shape[1]
    H, W = height, width
    Ho = (H - 1) // stride + 1
    Wo = (W - 1) // stride + 1
    assert M2 == Ho * Wo and MX == H * W

    kernel = functools.partial(_mm_bn_proj_kernel, stride=stride, H=H, W=W)
    flops = 2 * N * M2 * (C2 + Cin) * C3
    nbytes = (o2.size * o2.dtype.itemsize + x_flat.size * x_flat.dtype.itemsize
              + (w3.size + wsc.size) * 2
              + N * M2 * C3 * jnp.dtype(out_dtype).itemsize + 16 * C3)

    return pl.pallas_call(
        kernel,
        out_shape=jax.ShapeDtypeStruct((N, M2, C3), out_dtype),
        grid=(N,),
        in_specs=[
            pl.BlockSpec((None, M2, C2), lambda n: (n, 0, 0)),
            pl.BlockSpec((C2, C3), lambda n: (0, 0)),
            pl.BlockSpec((1, C3), lambda n: (0, 0)),
            pl.BlockSpec((1, C3), lambda n: (0, 0)),
            pl.BlockSpec((None, MX, Cin), lambda n: (n, 0, 0)),
            pl.BlockSpec((Cin, C3), lambda n: (0, 0)),
            pl.BlockSpec((1, C3), lambda n: (0, 0)),
            pl.BlockSpec((1, C3), lambda n: (0, 0)),
        ],
        out_specs=pl.BlockSpec((None, M2, C3), lambda n: (n, 0, 0)),
        scratch_shapes=[pltpu.VMEM((M2, Cin), x_flat.dtype)],
        compiler_params=pltpu.CompilerParams(
            dimension_semantics=("parallel",),
            vmem_limit_bytes=_VMEM_LIMIT),
        cost_estimate=pl.CostEstimate(flops=flops, transcendentals=0,
                                      bytes_accessed=nbytes),
    )(o2, w3, s3, b3, x_flat, wsc, ssc, bsc)


# ------------------------------ glue helpers -------------------------------

def _fold_bn(bn, cp, eps=1e-5):
    """Fold BatchNorm (inference) into (1, cp) scale/shift, zero-padded lanes."""
    scale = bn["gamma"] / jnp.sqrt(bn["var"] + eps)
    shift = bn["beta"] - bn["mean"] * scale
    c = scale.shape[0]
    scale = jnp.pad(scale, (0, cp - c))
    shift = jnp.pad(shift, (0, cp - c))
    return scale[None, :].astype(jnp.float32), shift[None, :].astype(jnp.float32)


def _pad_lanes(a, cp):
    return jnp.pad(a, ((0, 0), (0, cp - a.shape[1])))


def bottleneck_forward(x_nchw, p, stride):
    expansion = 4
    N, Cin, H, W = x_nchw.shape
    planes = p["w1"].shape[0]
    c1p = _round_up(planes, _LANES)
    c2p = c1p
    c3p = _round_up(expansion * planes, _LANES)
    bf16 = jnp.bfloat16
    Ho = (H - 1) // stride + 1
    Wo = (W - 1) // stride + 1

    # Boundary layout change only (see TODO at top of file).
    x = jnp.transpose(x_nchw, (0, 2, 3, 1)).astype(bf16)      # NHWC, bf16
    x_flat = x.reshape(N, H * W, Cin)

    # conv1 (1x1) + bn1 + relu
    w1 = _pad_lanes(p["w1"].reshape(planes, Cin).T, c1p).astype(bf16)
    s1, b1 = _fold_bn(p["bn1"], c1p)
    o1 = conv1x1_bn(x_flat.reshape(N * H * W, Cin), w1, s1, b1, relu=True)

    # conv2 (3x3, stride, pad=1) + bn2 + relu — whole-image direct conv
    # (halo pad + im2col built in VMEM, single large-M MXU matmul per image).
    w2 = jnp.transpose(p["w2"], (2, 3, 1, 0))                  # (3,3,Cin,Cout)
    w2 = jnp.pad(w2, ((0, 0), (0, 0), (0, c1p - planes), (0, c2p - planes)))
    w2 = w2.reshape(9 * c1p, c2p).astype(bf16)
    s2, b2 = _fold_bn(p["bn2"], c2p)
    o2 = conv3x3_bn(o1.reshape(N, H * W, c1p), w2, s2, b2,
                    stride=stride, height=H, width=W)           # (N, Ho*Wo, c2p)

    # conv3 (1x1) + bn3 + shortcut + relu (single fused kernel, bf16 output)
    w3 = p["w3"].reshape(expansion * planes, planes).T          # (planes, 4p)
    w3 = jnp.pad(w3, ((0, c2p - planes),
                      (0, c3p - expansion * planes))).astype(bf16)
    s3, b3 = _fold_bn(p["bn3"], c3p)

    if stride != 1 or Cin != expansion * planes:
        # projection shortcut (1x1 conv + BN), spatial subsample done in-kernel
        wsc = _pad_lanes(p["wsc"].reshape(expansion * planes, Cin).T,
                         c3p).astype(bf16)
        ssc, bsc = _fold_bn(p["bnsc"], c3p)
        o3 = conv3_proj_fused(o2, x_flat, w3, s3, b3, wsc, ssc, bsc,
                              stride=stride, height=H, width=W)
    else:
        # identity shortcut (bf16 add; lane-pad to c3p — no-op for real ResNet
        # widths since 4*planes is already a multiple of 128)
        r = _pad_lanes(x_flat.reshape(N * H * W, Cin), c3p).astype(bf16)
        o3 = conv1x1_bn(o2.reshape(N * Ho * Wo, c2p), w3, s3, b3, residual=r)

    out = o3.reshape(N, Ho, Wo, c3p)[..., :expansion * planes]
    return jnp.transpose(out, (0, 3, 1, 2)).astype(x_nchw.dtype)


# ------------------------- pure-JAX reference check -------------------------

def _conv_ref(x, w, stride=1, pad=0):
    return jax.lax.conv_general_dilated(
        x, w, (stride, stride), [(pad, pad), (pad, pad)],
        dimension_numbers=("NCHW", "OIHW", "NCHW"),
        precision=jax.lax.Precision.HIGHEST)


def _bn_ref(x, bn, eps=1e-5):
    inv = bn["gamma"] / jnp.sqrt(bn["var"] + eps)
    sh = bn["beta"] - bn["mean"] * inv
    return x * inv[None, :, None, None] + sh[None, :, None, None]


def bottleneck_ref(x, p, stride):
    expansion = 4
    out = jax.nn.relu(_bn_ref(_conv_ref(x, p["w1"]), p["bn1"]))
    out = jax.nn.relu(_bn_ref(_conv_ref(out, p["w2"], stride, 1), p["bn2"]))
    out = _bn_ref(_conv_ref(out, p["w3"]), p["bn3"])
    if stride != 1 or x.shape[1] != expansion * p["w1"].shape[0]:
        sc = _bn_ref(_conv_ref(x, p["wsc"], stride, 0), p["bnsc"])
    else:
        sc = x
    return jax.nn.relu(out + sc)


# ---------------------------------- main ------------------------------------

def _init_bn(key, c):
    k1, k2, k3, k4 = jax.random.split(key, 4)
    return {
        "gamma": 1.0 + 0.1 * jax.random.normal(k1, (c,), jnp.float32),
        "beta": 0.1 * jax.random.normal(k2, (c,), jnp.float32),
        "mean": 0.1 * jax.random.normal(k3, (c,), jnp.float32),
        "var": 0.5 + jnp.abs(jax.random.normal(k4, (c,), jnp.float32)) * 0.5,
    }


def _make_params(key, in_planes, planes, projection):
    expansion = 4
    ks = jax.random.split(key, 8)
    p = {
        "w1": 0.1 * jax.random.normal(ks[0], (planes, in_planes, 1, 1), jnp.float32),
        "bn1": _init_bn(ks[1], planes),
        "w2": 0.1 * jax.random.normal(ks[2], (planes, planes, 3, 3), jnp.float32),
        "bn2": _init_bn(ks[3], planes),
        "w3": 0.1 * jax.random.normal(ks[4], (expansion * planes, planes, 1, 1), jnp.float32),
        "bn3": _init_bn(ks[5], expansion * planes),
    }
    if projection:
        p["wsc"] = 0.1 * jax.random.normal(
            ks[6], (expansion * planes, in_planes, 1, 1), jnp.float32)
        p["bnsc"] = _init_bn(ks[7], expansion * planes)
    return p


if __name__ == "__main__":
    expansion = 4
    key = jax.random.PRNGKey(0)
    k_a, k_b, kx_a, kx_b = jax.random.split(key, 4)

    # Case A: projection shortcut (stride 2, channel change) — fused proj path.
    N, in_planes, planes, stride, H, W = 2, 8, 4, 2, 16, 16
    x_a = jax.random.normal(kx_a, (N, in_planes, H, W), jnp.float32)
    p_a = _make_params(k_a, in_planes, planes, projection=True)
    out_a = jax.block_until_ready(bottleneck_forward(x_a, p_a, stride))
    ref_a = bottleneck_ref(x_a, p_a, stride)
    assert out_a.shape == ref_a.shape == (N, expansion * planes, H // stride, W // stride)
    # bf16 MXU inputs / bf16 activation stores with f32 accumulation.
    assert jnp.allclose(out_a, ref_a, atol=2e-2, rtol=2e-2), (
        float(jnp.max(jnp.abs(out_a - ref_a))))

    # Case B: identity shortcut (stride 1, in_planes == expansion*planes).
    N, in_planes, planes, stride, H, W = 2, 16, 4, 1, 8, 8
    x_b = jax.random.normal(kx_b, (N, in_planes, H, W), jnp.float32)
    p_b = _make_params(k_b, in_planes, planes, projection=False)
    out_b = jax.block_until_ready(bottleneck_forward(x_b, p_b, stride))
    ref_b = bottleneck_ref(x_b, p_b, stride)
    assert out_b.shape == ref_b.shape == (N, expansion * planes, H, W)
    assert jnp.allclose(out_b, ref_b, atol=2e-2, rtol=2e-2), (
        float(jnp.max(jnp.abs(out_b - ref_b))))

    print("KERNEL_OK")
</pallas_src>

<mosaic_0001>
module attributes {stable_mosaic.version = 11 : i64} {
  func.func @_mm_bn_kernel(%arg0: i32, %arg1: memref<512x8xbf16, #tpu.memory_space<vmem>>, %arg2: memref<8x128xbf16, #tpu.memory_space<vmem>>, %arg3: memref<1x128xf32, #tpu.memory_space<vmem>>, %arg4: memref<1x128xf32, #tpu.memory_space<vmem>>, %arg5: memref<512x128xbf16, #tpu.memory_space<vmem>>) attributes {dimension_semantics = [#tpu.dimension_semantics<parallel>], iteration_bounds = array<i64: 1>, scalar_prefetch = 0 : i64, scratch_operands = 0 : i64, tpu.core_type = #tpu.core_type<tc>, window_params = [{transform_indices = @transform_0, window_bounds = array<i64: 512, 8>}, {pipeline_mode = #tpu.pipeline_mode<synchronous>, transform_indices = @transform_1, window_bounds = array<i64: 8, 128>}, {pipeline_mode = #tpu.pipeline_mode<synchronous>, transform_indices = @transform_2, window_bounds = array<i64: 1, 128>}, {pipeline_mode = #tpu.pipeline_mode<synchronous>, transform_indices = @transform_3, window_bounds = array<i64: 1, 128>}, {transform_indices = @transform_4, window_bounds = array<i64: 512, 128>}]} {
    %c0 = arith.constant 0 : index
    %c0_0 = arith.constant 0 : index
    %0 = vector.load %arg1[%c0, %c0_0] : memref<512x8xbf16, #tpu.memory_space<vmem>>, vector<512x8xbf16>
    %c0_1 = arith.constant 0 : index
    %c0_2 = arith.constant 0 : index
    %1 = vector.load %arg2[%c0_1, %c0_2] : memref<8x128xbf16, #tpu.memory_space<vmem>>, vector<8x128xbf16>
    %cst = arith.constant dense<0.000000e+00> : vector<512x128xf32>
    %2 = tpu.matmul %0, %1, %cst {dimension_numbers = #tpu.dot_dimension_numbers<[1], [0], [0], [1], [0, 0, 1, 1], [], []>} : vector<512x8xbf16>, vector<8x128xbf16>, vector<512x128xf32> -> vector<512x128xf32>
    %c0_3 = arith.constant 0 : index
    %c0_4 = arith.constant 0 : index
    %3 = vector.load %arg3[%c0_3, %c0_4] : memref<1x128xf32, #tpu.memory_space<vmem>>, vector<1x128xf32>
    %4 = vector.broadcast %3 : vector<1x128xf32> to vector<512x128xf32>
    %5 = arith.mulf %2, %4 : vector<512x128xf32>
    %c0_5 = arith.constant 0 : index
    %c0_6 = arith.constant 0 : index
    %6 = vector.load %arg4[%c0_5, %c0_6] : memref<1x128xf32, #tpu.memory_space<vmem>>, vector<1x128xf32>
    %7 = vector.broadcast %6 : vector<1x128xf32> to vector<512x128xf32>
    %8 = arith.addf %5, %7 : vector<512x128xf32>
    %cst_7 = arith.constant 0.000000e+00 : f32
    %9 = vector.broadcast %cst_7 : f32 to vector<512x128xf32>
    %10 = arith.maximumf %8, %9 : vector<512x128xf32>
    %11 = arith.truncf %10 : vector<512x128xf32> to vector<512x128xbf16>
    %c0_8 = arith.constant 0 : index
    %c0_9 = arith.constant 0 : index
    %12 = vector.load %arg5[%c0_8, %c0_9] : memref<512x128xbf16, #tpu.memory_space<vmem>>, vector<512x128xbf16>
    tpu.vector_store %arg5[%c0_8, %c0_9], %11 {strides = array<i32>} : memref<512x128xbf16, #tpu.memory_space<vmem>>, vector<512x128xbf16>,
    return
  }
  func.func @transform_0(%arg0: i32) -> (i32, i32) {
    %c0_i32 = arith.constant 0 : i32
    %c0_i32_0 = arith.constant 0 : i32
    return %arg0, %c0_i32 : i32, i32
  }
  func.func @transform_1(%arg0: i32) -> (i32, i32) {
    %c0_i32 = arith.constant 0 : i32
    %c0_i32_0 = arith.constant 0 : i32
    %c0_i32_1 = arith.constant 0 : i32
    return %c0_i32, %c0_i32_0 : i32, i32
  }
  func.func @transform_2(%arg0: i32) -> (i32, i32) {
    %c0_i32 = arith.constant 0 : i32
    %c0_i32_0 = arith.constant 0 : i32
    %c0_i32_1 = arith.constant 0 : i32
    return %c0_i32, %c0_i32_0 : i32, i32
  }
  func.func @transform_3(%arg0: i32) -> (i32, i32) {
    %c0_i32 = arith.constant 0 : i32
    %c0_i32_0 = arith.constant 0 : i32
    %c0_i32_1 = arith.constant 0 : i32
    return %c0_i32, %c0_i32_0 : i32, i32
  }
  func.func @transform_4(%arg0: i32) -> (i32, i32) {
    %c0_i32 = arith.constant 0 : i32
    %c0_i32_0 = arith.constant 0 : i32
    return %arg0, %c0_i32 : i32, i32
  }
}

</mosaic_0001>

<llo_original>
// kernel: tpu_custom_call.1
$region0: #{tpu_custom_call.1}
  #allocation0 [shape = 'u32[]', space=smem, size = 0x4, offset = 0x4, fixed_abs, tag = 'smem constant byte address 0x4 - core index']
  #allocation1 [shape = 'u32[72,128]{1,0:T(1,128)}', space=vmem, size = 0x9000, scoped, tag = 'internal scratch']
  %s0 = inlined_call_operand.vmem [shape: bf16[512,8], index: 0, kind: input, shape index: {}]
  %s1 = inlined_call_operand.vmem [shape: bf16[8,128], index: 1, kind: input, shape index: {}]
  %s2 = inlined_call_operand.vmem [shape: f32[1,128], index: 2, kind: input, shape index: {}]
  %s3 = inlined_call_operand.vmem [shape: f32[1,128], index: 3, kind: input, shape index: {}]
  %s4 = inlined_call_operand.hbm [shape: bf16[512,128], index: 4, kind: output, shape index: {}]
  %s5 = sld [smem:[#allocation0]]
  $region26: #{tpu_custom_call.1} parent=0
    _
  %s7 = ssub.s32 1, %s5
  %s8 = scalar_select 0, %s7, %s5
  $region1: #{tpu_custom_call.1} parent=0
    #allocation2 [shape = 'u8[131072]{0}', space=vmem, size = 0x20000, scoped, tag = 'output window, operand 0, single buffered']
    #allocation3 [shape = 's32[1]{0}', space=sflag, size = 0x4, scoped, tag = 'scoped memory for tpu_custom_call.1']
    %9 = vsyncpa [#allocation3], 0
    // Predicated region
    $region2: #{tpu_custom_call.1} parent=1 // pred_check
      _
    $region3: #{tpu_custom_call.1} parent=1 // pred_check_branch
      %11 = sbr.rel (0) target = $region5
    $region4: #{tpu_custom_call.1} parent=1 // pred_region
      _
    $region5: #{tpu_custom_call.1} parent=1 // pred_fallthru
      _
    // Predicated region
    $region6: #{tpu_custom_call.1} parent=1 // pred_check
      _
    $region7: #{tpu_custom_call.1} parent=1 // pred_check_branch
      %13 = sbr.rel (0) target = $region9
    $region8: #{tpu_custom_call.1} parent=1 // pred_region
      _
    $region9: #{tpu_custom_call.1} parent=1 // pred_fallthru
      _
    // Predicated region
    $region10: #{tpu_custom_call.1} parent=1 // pred_check
      _
    $region11: #{tpu_custom_call.1} parent=1 // pred_check_branch
      %15 = sbr.rel (0) target = $region13
    $region12: #{tpu_custom_call.1} parent=1 // pred_region
      _
    $region13: #{tpu_custom_call.1} parent=1 // pred_fallthru
      _
    // Predicated region
    $region14: #{tpu_custom_call.1} parent=1 // pred_check
      _
    $region15: #{tpu_custom_call.1} parent=1 // pred_check_branch
      %17 = sbr.rel (0) target = $region17
    $region16: #{tpu_custom_call.1} parent=1 // pred_region
      _
    $region17: #{tpu_custom_call.1} parent=1 // pred_fallthru
      _
    %v19 = vld [vmem:[%s0] sm:$0xf]
    %v20 = vld [vmem:[%s0 + $0x4] sm:$0xf]
    %v21 = vld [vmem:[%s0 + $0x8] sm:$0xf]
    %v22 = vld [vmem:[%s0 + $0xc] sm:$0xf]
    %v23 = vld [vmem:[%s0 + $0x10] sm:$0xf]
    %v24 = vld [vmem:[%s0 + $0x14] sm:$0xf]
    %v25 = vld [vmem:[%s0 + $0x18] sm:$0xf]
    %v26 = vld [vmem:[%s0 + $0x1c] sm:$0xf]
    %v27 = vld [vmem:[%s0 + $0x20] sm:$0xf]
    %v28 = vld [vmem:[%s0 + $0x24] sm:$0xf]
    %v29 = vld [vmem:[%s0 + $0x28] sm:$0xf]
    %v30 = vld [vmem:[%s0 + $0x2c] sm:$0xf]
    %v31 = vld [vmem:[%s0 + $0x30] sm:$0xf]
    %v32 = vld [vmem:[%s0 + $0x34] sm:$0xf]
    %v33 = vld [vmem:[%s0 + $0x38] sm:$0xf]
    %v34 = vld [vmem:[%s0 + $0x3c] sm:$0xf]
    %v35 = vld [vmem:[%s0 + $0x40] sm:$0xf]
    %v36 = vld [vmem:[%s0 + $0x44] sm:$0xf]
    %v37 = vld [vmem:[%s0 + $0x48] sm:$0xf]
    %v38 = vld [vmem:[%s0 + $0x4c] sm:$0xf]
    %v39 = vld [vmem:[%s0 + $0x50] sm:$0xf]
    %v40 = vld [vmem:[%s0 + $0x54] sm:$0xf]
    %v41 = vld [vmem:[%s0 + $0x58] sm:$0xf]
    %v42 = vld [vmem:[%s0 + $0x5c] sm:$0xf]
    %v43 = vld [vmem:[%s0 + $0x60] sm:$0xf]
    %v44 = vld [vmem:[%s0 + $0x64] sm:$0xf]
    %v45 = vld [vmem:[%s0 + $0x68] sm:$0xf]
    %v46 = vld [vmem:[%s0 + $0x6c] sm:$0xf]
    %v47 = vld [vmem:[%s0 + $0x70] sm:$0xf]
    %v48 = vld [vmem:[%s0 + $0x74] sm:$0xf]
    %v49 = vld [vmem:[%s0 + $0x78] sm:$0xf]
    %v50 = vld [vmem:[%s0 + $0x7c] sm:$0xf]
    %v51 = vld [vmem:[%s0 + $0x80] sm:$0xf]
    %v52 = vld [vmem:[%s0 + $0x84] sm:$0xf]
    %v53 = vld [vmem:[%s0 + $0x88] sm:$0xf]
    %v54 = vld [vmem:[%s0 + $0x8c] sm:$0xf]
    %v55 = vld [vmem:[%s0 + $0x90] sm:$0xf]
    %v56 = vld [vmem:[%s0 + $0x94] sm:$0xf]
    %v57 = vld [vmem:[%s0 + $0x98] sm:$0xf]
    %v58 = vld [vmem:[%s0 + $0x9c] sm:$0xf]
    %v59 = vld [vmem:[%s0 + $0xa0] sm:$0xf]
    %v60 = vld [vmem:[%s0 + $0xa4] sm:$0xf]
    %v61 = vld [vmem:[%s0 + $0xa8] sm:$0xf]
    %v62 = vld [vmem:[%s0 + $0xac] sm:$0xf]
    %v63 = vld [vmem:[%s0 + $0xb0] sm:$0xf]
    %v64 = vld [vmem:[%s0 + $0xb4] sm:$0xf]
    %v65 = vld [vmem:[%s0 + $0xb8] sm:$0xf]
    %v66 = vld [vmem:[%s0 + $0xbc] sm:$0xf]
    %v67 = vld [vmem:[%s0 + $0xc0] sm:$0xf]
    %v68 = vld [vmem:[%s0 + $0xc4] sm:$0xf]
    %v69 = vld [vmem:[%s0 + $0xc8] sm:$0xf]
    %v70 = vld [vmem:[%s0 + $0xcc] sm:$0xf]
    %v71 = vld [vmem:[%s0 + $0xd0] sm:$0xf]
    %v72 = vld [vmem:[%s0 + $0xd4] sm:$0xf]
    %v73 = vld [vmem:[%s0 + $0xd8] sm:$0xf]
    %v74 = vld [vmem:[%s0 + $0xdc] sm:$0xf]
    %v75 = vld [vmem:[%s0 + $0xe0] sm:$0xf]
    %v76 = vld [vmem:[%s0 + $0xe4] sm:$0xf]
    %v77 = vld [vmem:[%s0 + $0xe8] sm:$0xf]
    %v78 = vld [vmem:[%s0 + $0xec] sm:$0xf]
    %v79 = vld [vmem:[%s0 + $0xf0] sm:$0xf]
    %v80 = vld [vmem:[%s0 + $0xf4] sm:$0xf]
    %v81 = vld [vmem:[%s0 + $0xf8] sm:$0xf]
    %v82 = vld [vmem:[%s0 + $0xfc] sm:$0xf]
    %v83 = vld [vmem:[%s1] sm:$0xf]
    %v148 = vunpack.c.l.b16 %v19
    %v149 = vunpack.c.l.b16 %v20
    %v150 = vunpack.c.l.b16 %v21
    %v151 = vunpack.c.l.b16 %v22
    %v152 = vunpack.c.l.b16 %v23
    %v153 = vunpack.c.l.b16 %v24
    %v154 = vunpack.c.l.b16 %v25
    %v155 = vunpack.c.l.b16 %v26
    %v156 = vunpack.c.l.b16 %v27
    %v157 = vunpack.c.l.b16 %v28
    %v158 = vunpack.c.l.b16 %v29
    %v159 = vunpack.c.l.b16 %v30
    %v160 = vunpack.c.l.b16 %v31
    %v161 = vunpack.c.l.b16 %v32
    %v162 = vunpack.c.l.b16 %v33
    %v163 = vunpack.c.l.b16 %v34
    %v164 = vunpack.c.l.b16 %v35
    %v165 = vunpack.c.l.b16 %v36
    %v166 = vunpack.c.l.b16 %v37
    %v167 = vunpack.c.l.b16 %v38
    %v168 = vunpack.c.l.b16 %v39
    %v169 = vunpack.c.l.b16 %v40
    %v170 = vunpack.c.l.b16 %v41
    %v171 = vunpack.c.l.b16 %v42
    %v172 = vunpack.c.l.b16 %v43
    %v173 = vunpack.c.l.b16 %v44
    %v174 = vunpack.c.l.b16 %v45
    %v175 = vunpack.c.l.b16 %v46
    %v176 = vunpack.c.l.b16 %v47
    %v177 = vunpack.c.l.b16 %v48
    %v178 = vunpack.c.l.b16 %v49
    %v179 = vunpack.c.l.b16 %v50
    %v180 = vunpack.c.l.b16 %v51
    %v181 = vunpack.c.l.b16 %v52
    %v182 = vunpack.c.l.b16 %v53
    %v183 = vunpack.c.l.b16 %v54
    %v184 = vunpack.c.l.b16 %v55
    %v185 = vunpack.c.l.b16 %v56
    %v186 = vunpack.c.l.b16 %v57
    %v187 = vunpack.c.l.b16 %v58
    %v188 = vunpack.c.l.b16 %v59
    %v189 = vunpack.c.l.b16 %v60
    %v190 = vunpack.c.l.b16 %v61
    %v191 = vunpack.c.l.b16 %v62
    %v192 = vunpack.c.l.b16 %v63
    %v193 = vunpack.c.l.b16 %v64
    %v194 = vunpack.c.l.b16 %v65
    %v195 = vunpack.c.l.b16 %v66
    %v196 = vunpack.c.l.b16 %v67
    %v197 = vunpack.c.l.b16 %v68
    %v198 = vunpack.c.l.b16 %v69
    %v199 = vunpack.c.l.b16 %v70
    %v200 = vunpack.c.l.b16 %v71
    %v201 = vunpack.c.l.b16 %v72
    %v202 = vunpack.c.l.b16 %v73
    %v203 = vunpack.c.l.b16 %v74
    %v204 = vunpack.c.l.b16 %v75
    %v205 = vunpack.c.l.b16 %v76
    %v206 = vunpack.c.l.b16 %v77
    %v207 = vunpack.c.l.b16 %v78
    %v208 = vunpack.c.l.b16 %v79
    %v209 = vunpack.c.l.b16 %v80
    %v210 = vunpack.c.l.b16 %v81
    %v211 = vunpack.c.l.b16 %v82
    %v212 = vpack.c.b16 %v149, %v148
    %v213 = vpack.c.b16 %v151, %v150
    %v214 = vpack.c.b16 %v153, %v152
    %v215 = vpack.c.b16 %v155, %v154
    %v216 = vpack.c.b16 %v157, %v156
    %v217 = vpack.c.b16 %v159, %v158
    %v218 = vpack.c.b16 %v161, %v160
    %v219 = vpack.c.b16 %v163, %v162
    %v220 = vpack.c.b16 %v165, %v164
    %v221 = vpack.c.b16 %v167, %v166
    %v222 = vpack.c.b16 %v169, %v168
    %v223 = vpack.c.b16 %v171, %v170
    %v224 = vpack.c.b16 %v173, %v172
    %v225 = vpack.c.b16 %v175, %v174
    %v226 = vpack.c.b16 %v177, %v176
    %v227 = vpack.c.b16 %v179, %v178
    %v228 = vpack.c.b16 %v181, %v180
    %v229 = vpack.c.b16 %v183, %v182
    %v230 = vpack.c.b16 %v185, %v184
    %v231 = vpack.c.b16 %v187, %v186
    %v232 = vpack.c.b16 %v189, %v188
    %v233 = vpack.c.b16 %v191, %v190
    %v234 = vpack.c.b16 %v193, %v192
    %v235 = vpack.c.b16 %v195, %v194
    %v236 = vpack.c.b16 %v197, %v196
    %v237 = vpack.c.b16 %v199, %v198
    %v238 = vpack.c.b16 %v201, %v200
    %v239 = vpack.c.b16 %v203, %v202
    %v240 = vpack.c.b16 %v205, %v204
    %v241 = vpack.c.b16 %v207, %v206
    %v242 = vpack.c.b16 %v209, %v208
    %v243 = vpack.c.b16 %v211, %v210
    %vm244 = vcmask 64512
    %v246 = vsel %vm244, %v212, 0
    %v249 = vsel %vm244, %v213, 0
    %v252 = vsel %vm244, %v214, 0
    %v255 = vsel %vm244, %v215, 0
    %v258 = vsel %vm244, %v216, 0
    %v261 = vsel %vm244, %v217, 0
    %v264 = vsel %vm244, %v218, 0
    %v267 = vsel %vm244, %v219, 0
    %v270 = vsel %vm244, %v220, 0
    %v273 = vsel %vm244, %v221, 0
    %v276 = vsel %vm244, %v222, 0
    %v279 = vsel %vm244, %v223, 0
    %v282 = vsel %vm244, %v224, 0
    %v285 = vsel %vm244, %v225, 0
    %v288 = vsel %vm244, %v226, 0
    %v291 = vsel %vm244, %v227, 0
    %v294 = vsel %vm244, %v228, 0
    %v297 = vsel %vm244, %v229, 0
    %v300 = vsel %vm244, %v230, 0
    %v303 = vsel %vm244, %v231, 0
    %v306 = vsel %vm244, %v232, 0
    %v309 = vsel %vm244, %v233, 0
    %v312 = vsel %vm244, %v234, 0
    %v315 = vsel %vm244, %v235, 0
    %v318 = vsel %vm244, %v236, 0
    %v321 = vsel %vm244, %v237, 0
    %v324 = vsel %vm244, %v238, 0
    %v327 = vsel %vm244, %v239, 0
    %v330 = vsel %vm244, %v240, 0
    %v333 = vsel %vm244, %v241, 0
    %v336 = vsel %vm244, %v242, 0
    %v339 = vsel %vm244, %v243, 0
    %vm341 = vcmask 1043456
    %v343 = vsel %vm341, %v83, 0
    %345 = vmatpush.bf16.msra.mxu0 0
    %346 = vmatpush.bf16.msra.mxu0 0
    %347 = vmatpush.bf16.msra.mxu0 0
    %348 = vmatpush.bf16.msra.mxu0 0
    %349 = vmatpush.bf16.msra.mxu0 0
    %350 = vmatpush.bf16.msra.mxu0 0
    %351 = vmatpush.bf16.msra.mxu0 0
    %352 = vmatpush.bf16.msra.mxu0 %v343
    %353 = vmatmul.bf16.gmra.mxu0 %v246
    %v354 = vpop.f32.mrf.mxu0
    %v355 = vadd.f32 0.0, %v354
    %v356 = vpop.f32.mrf.mxu0
    %v357 = vadd.f32 0.0, %v356
    %358 = vmatmul.bf16.gmra.mxu0 %v249
    %v359 = vpop.f32.mrf.mxu0
    %v360 = vadd.f32 0.0, %v359
    %v361 = vpop.f32.mrf.mxu0
    %v362 = vadd.f32 0.0, %v361
    %363 = vmatmul.bf16.gmra.mxu0 %v252
    %v364 = vpop.f32.mrf.mxu0
    %v365 = vadd.f32 0.0, %v364
    %v366 = vpop.f32.mrf.mxu0
    %v367 = vadd.f32 0.0, %v366
    %368 = vmatmul.bf16.gmra.mxu0 %v255
    %v369 = vpop.f32.mrf.mxu0
    %v370 = vadd.f32 0.0, %v369
    %v371 = vpop.f32.mrf.mxu0
    %v372 = vadd.f32 0.0, %v371
    %373 = vmatmul.bf16.gmra.mxu0 %v258
    %v374 = vpop.f32.mrf.mxu0
    %v375 = vadd.f32 0.0, %v374
    %v376 = vpop.f32.mrf.mxu0
    %v377 = vadd.f32 0.0, %v376
    %378 = vmatmul.bf16.gmra.mxu0 %v261
    %v379 = vpop.f32.mrf.mxu0
    %v380 = vadd.f32 0.0, %v379
    %v381 = vpop.f32.mrf.mxu0
    %v382 = vadd.f32 0.0, %v381
    %383 = vmatmul.bf16.gmra.mxu0 %v264
    %v384 = vpop.f32.mrf.mxu0
    %v385 = vadd.f32 0.0, %v384
    %v386 = vpop.f32.mrf.mxu0
    %v387 = vadd.f32 0.0, %v386
    %388 = vmatmul.bf16.gmra.mxu0 %v267
    %v389 = vpop.f32.mrf.mxu0
    %v390 = vadd.f32 0.0, %v389
    %v391 = vpop.f32.mrf.mxu0
    %v392 = vadd.f32 0.0, %v391
    %393 = vmatmul.bf16.gmra.mxu0 %v270
    %v394 = vpop.f32.mrf.mxu0
    %v395 = vadd.f32 0.0, %v394
    %v396 = vpop.f32.mrf.mxu0
    %v397 = vadd.f32 0.0, %v396
    %398 = vmatmul.bf16.gmra.mxu0 %v273
    %v399 = vpop.f32.mrf.mxu0
    %v400 = vadd.f32 0.0, %v399
    %v401 = vpop.f32.mrf.mxu0
    %v402 = vadd.f32 0.0, %v401
    %403 = vmatmul.bf16.gmra.mxu0 %v276
    %v404 = vpop.f32.mrf.mxu0
    %v405 = vadd.f32 0.0, %v404
    %v406 = vpop.f32.mrf.mxu0
    %v407 = vadd.f32 0.0, %v406
    %408 = vmatmul.bf16.gmra.mxu0 %v279
    %v409 = vpop.f32.mrf.mxu0
    %v410 = vadd.f32 0.0, %v409
    %v411 = vpop.f32.mrf.mxu0
    %v412 = vadd.f32 0.0, %v411
    %413 = vmatmul.bf16.gmra.mxu0 %v282
    %v414 = vpop.f32.mrf.mxu0
    %v415 = vadd.f32 0.0, %v414
    %v416 = vpop.f32.mrf.mxu0
    %v417 = vadd.f32 0.0, %v416
    %418 = vmatmul.bf16.gmra.mxu0 %v285
    %v419 = vpop.f32.mrf.mxu0
    %v420 = vadd.f32 0.0, %v419
    %v421 = vpop.f32.mrf.mxu0
    %v422 = vadd.f32 0.0, %v421
    %423 = vmatmul.bf16.gmra.mxu0 %v288
    %v424 = vpop.f32.mrf.mxu0
    %v425 = vadd.f32 0.0, %v424
    %v426 = vpop.f32.mrf.mxu0
    %v427 = vadd.f32 0.0, %v426
    %428 = vmatmul.bf16.gmra.mxu0 %v291
    %v429 = vpop.f32.mrf.mxu0
    %v430 = vadd.f32 0.0, %v429
    %v431 = vpop.f32.mrf.mxu0
    %v432 = vadd.f32 0.0, %v431
    %433 = vmatmul.bf16.gmra.mxu0 %v294
    %v434 = vpop.f32.mrf.mxu0
    %v435 = vadd.f32 0.0, %v434
    %v436 = vpop.f32.mrf.mxu0
    %v437 = vadd.f32 0.0, %v436
    %438 = vmatmul.bf16.gmra.mxu0 %v297
    %v439 = vpop.f32.mrf.mxu0
    %v440 = vadd.f32 0.0, %v439
    %v441 = vpop.f32.mrf.mxu0
    %v442 = vadd.f32 0.0, %v441
    %443 = vmatmul.bf16.gmra.mxu0 %v300
    %v444 = vpop.f32.mrf.mxu0
    %v445 = vadd.f32 0.0, %v444
    %v446 = vpop.f32.mrf.mxu0
    %v447 = vadd.f32 0.0, %v446
    %448 = vmatmul.bf16.gmra.mxu0 %v303
    %v449 = vpop.f32.mrf.mxu0
    %v450 = vadd.f32 0.0, %v449
    %v451 = vpop.f32.mrf.mxu0
    %v452 = vadd.f32 0.0, %v451
    %453 = vmatmul.bf16.gmra.mxu0 %v306
    %v454 = vpop.f32.mrf.mxu0
    %v455 = vadd.f32 0.0, %v454
    %v456 = vpop.f32.mrf.mxu0
    %v457 = vadd.f32 0.0, %v456
    %458 = vmatmul.bf16.gmra.mxu0 %v309
    %v459 = vpop.f32.mrf.mxu0
    %v460 = vadd.f32 0.0, %v459
    %v461 = vpop.f32.mrf.mxu0
    %v462 = vadd.f32 0.0, %v461
    %463 = vmatmul.bf16.gmra.mxu0 %v312
    %v464 = vpop.f32.mrf.mxu0
    %v465 = vadd.f32 0.0, %v464
    %v466 = vpop.f32.mrf.mxu0
    %v467 = vadd.f32 0.0, %v466
    %468 = vmatmul.bf16.gmra.mxu0 %v315
    %v469 = vpop.f32.mrf.mxu0
    %v470 = vadd.f32 0.0, %v469
    %v471 = vpop.f32.mrf.mxu0
    %v472 = vadd.f32 0.0, %v471
    %473 = vmatmul.bf16.gmra.mxu0 %v318
    %v474 = vpop.f32.mrf.mxu0
    %v475 = vadd.f32 0.0, %v474
    %v476 = vpop.f32.mrf.mxu0
    %v477 = vadd.f32 0.0, %v476
    %478 = vmatmul.bf16.gmra.mxu0 %v321
    %v479 = vpop.f32.mrf.mxu0
    %v480 = vadd.f32 0.0, %v479
    %v481 = vpop.f32.mrf.mxu0
    %v482 = vadd.f32 0.0, %v481
    %483 = vmatmul.bf16.gmra.mxu0 %v324
    %v484 = vpop.f32.mrf.mxu0
    %v485 = vadd.f32 0.0, %v484
    %v486 = vpop.f32.mrf.mxu0
    %v487 = vadd.f32 0.0, %v486
    %488 = vmatmul.bf16.gmra.mxu0 %v327
    %v489 = vpop.f32.mrf.mxu0
    %v490 = vadd.f32 0.0, %v489
    %v491 = vpop.f32.mrf.mxu0
    %v492 = vadd.f32 0.0, %v491
    %493 = vmatmul.bf16.gmra.mxu0 %v330
    %v494 = vpop.f32.mrf.mxu0
    %v495 = vadd.f32 0.0, %v494
    %v496 = vpop.f32.mrf.mxu0
    %v497 = vadd.f32 0.0, %v496
    %498 = vmatmul.bf16.gmra.mxu0 %v333
    %v499 = vpop.f32.mrf.mxu0
    %v500 = vadd.f32 0.0, %v499
    %v501 = vpop.f32.mrf.mxu0
    %v502 = vadd.f32 0.0, %v501
    %503 = vmatmul.bf16.gmra.mxu0 %v336
    %v504 = vpop.f32.mrf.mxu0
    %v505 = vadd.f32 0.0, %v504
    %v506 = vpop.f32.mrf.mxu0
    %v507 = vadd.f32 0.0, %v506
    %508 = vmatmul.bf16.gmra.mxu0 %v339
    %v509 = vpop.f32.mrf.mxu0
    %v510 = vadd.f32 0.0, %v509
    %v511 = vpop.f32.mrf.mxu0
    %v512 = vadd.f32 0.0, %v511
    %513 = vdwg.mxu0
    %v514 = vld [vmem:[%s2] sm:$0x1]
    %v516 = vperm.slane %v514, 0
    %v518 = vmul.f32 %v355, %v516
    %v519 = vmul.f32 %v357, %v516
    %v520 = vmul.f32 %v360, %v516
    %v521 = vmul.f32 %v362, %v516
    %v522 = vmul.f32 %v365, %v516
    %v523 = vmul.f32 %v367, %v516
    %v524 = vmul.f32 %v370, %v516
    %v525 = vmul.f32 %v372, %v516
    %v526 = vmul.f32 %v375, %v516
    %v527 = vmul.f32 %v377, %v516
    %v528 = vmul.f32 %v380, %v516
    %v529 = vmul.f32 %v382, %v516
    %v530 = vmul.f32 %v385, %v516
    %v531 = vmul.f32 %v387, %v516
    %v532 = vmul.f32 %v390, %v516
    %v533 = vmul.f32 %v392, %v516
    %v534 = vmul.f32 %v395, %v516
    %v535 = vmul.f32 %v397, %v516
    %v536 = vmul.f32 %v400, %v516
    %v537 = vmul.f32 %v402, %v516
    %v538 = vmul.f32 %v405, %v516
    %v539 = vmul.f32 %v407, %v516
    %v540 = vmul.f32 %v410, %v516
    %v541 = vmul.f32 %v412, %v516
    %v542 = vmul.f32 %v415, %v516
    %v543 = vmul.f32 %v417, %v516
    %v544 = vmul.f32 %v420, %v516
    %v545 = vmul.f32 %v422, %v516
    %v546 = vmul.f32 %v425, %v516
    %v547 = vmul.f32 %v427, %v516
    %v548 = vmul.f32 %v430, %v516
    %v549 = vmul.f32 %v432, %v516
    %v550 = vmul.f32 %v435, %v516
    %v551 = vmul.f32 %v437, %v516
    %v552 = vmul.f32 %v440, %v516
    %v553 = vmul.f32 %v442, %v516
    %v554 = vmul.f32 %v445, %v516
    %v555 = vmul.f32 %v447, %v516
    %v556 = vmul.f32 %v450, %v516
    %v557 = vmul.f32 %v452, %v516
    %v558 = vmul.f32 %v455, %v516
    %v559 = vmul.f32 %v457, %v516
    %v560 = vmul.f32 %v460, %v516
    %v561 = vmul.f32 %v462, %v516
    %v562 = vmul.f32 %v465, %v516
    %v563 = vmul.f32 %v467, %v516
    %v564 = vmul.f32 %v470, %v516
    %v565 = vmul.f32 %v472, %v516
    %v566 = vmul.f32 %v475, %v516
    %v567 = vmul.f32 %v477, %v516
    %v568 = vmul.f32 %v480, %v516
    %v569 = vmul.f32 %v482, %v516
    %v570 = vmul.f32 %v485, %v516
    %v571 = vmul.f32 %v487, %v516
    %v572 = vmul.f32 %v490, %v516
    %v573 = vmul.f32 %v492, %v516
    %v574 = vmul.f32 %v495, %v516
    %v575 = vmul.f32 %v497, %v516
    %v576 = vmul.f32 %v500, %v516
    %v577 = vmul.f32 %v502, %v516
    %v578 = vmul.f32 %v505, %v516
    %v579 = vmul.f32 %v507, %v516
    %v580 = vmul.f32 %v510, %v516
    %v581 = vmul.f32 %v512, %v516
    %v582 = vld [vmem:[%s3] sm:$0x1]
    %v584 = vperm.slane %v582, 0
    %v586 = vadd.f32 %v518, %v584
    %v587 = vadd.f32 %v519, %v584
    %v588 = vadd.f32 %v520, %v584
    %v589 = vadd.f32 %v521, %v584
    %v590 = vadd.f32 %v522, %v584
    %v591 = vadd.f32 %v523, %v584
    %v592 = vadd.f32 %v524, %v584
    %v593 = vadd.f32 %v525, %v584
    %v594 = vadd.f32 %v526, %v584
    %v595 = vadd.f32 %v527, %v584
    %v596 = vadd.f32 %v528, %v584
    %v597 = vadd.f32 %v529, %v584
    %v598 = vadd.f32 %v530, %v584
    %v599 = vadd.f32 %v531, %v584
    %v600 = vadd.f32 %v532, %v584
    %v601 = vadd.f32 %v533, %v584
    %v602 = vadd.f32 %v534, %v584
    %v603 = vadd.f32 %v535, %v584
    %v604 = vadd.f32 %v536, %v584
    %v605 = vadd.f32 %v537, %v584
    %v606 = vadd.f32 %v538, %v584
    %v607 = vadd.f32 %v539, %v584
    %v608 = vadd.f32 %v540, %v584
    %v609 = vadd.f32 %v541, %v584
    %v610 = vadd.f32 %v542, %v584
    %v611 = vadd.f32 %v543, %v584
    %v612 = vadd.f32 %v544, %v584
    %v613 = vadd.f32 %v545, %v584
    %v614 = vadd.f32 %v546, %v584
    %v615 = vadd.f32 %v547, %v584
    %v616 = vadd.f32 %v548, %v584
    %v617 = vadd.f32 %v549, %v584
    %v618 = vadd.f32 %v550, %v584
    %v619 = vadd.f32 %v551, %v584
    %v620 = vadd.f32 %v552, %v584
    %v621 = vadd.f32 %v553, %v584
    %v622 = vadd.f32 %v554, %v584
    %v623 = vadd.f32 %v555, %v584
    %v624 = vadd.f32 %v556, %v584
    %v625 = vadd.f32 %v557, %v584
    %v626 = vadd.f32 %v558, %v584
    %v627 = vadd.f32 %v559, %v584
    %v628 = vadd.f32 %v560, %v584
    %v629 = vadd.f32 %v561, %v584
    %v630 = vadd.f32 %v562, %v584
    %v631 = vadd.f32 %v563, %v584
    %v632 = vadd.f32 %v564, %v584
    %v633 = vadd.f32 %v565, %v584
    %v634 = vadd.f32 %v566, %v584
    %v635 = vadd.f32 %v567, %v584
    %v636 = vadd.f32 %v568, %v584
    %v637 = vadd.f32 %v569, %v584
    %v638 = vadd.f32 %v570, %v584
    %v639 = vadd.f32 %v571, %v584
    %v640 = vadd.f32 %v572, %v584
    %v641 = vadd.f32 %v573, %v584
    %v642 = vadd.f32 %v574, %v584
    %v643 = vadd.f32 %v575, %v584
    %v644 = vadd.f32 %v576, %v584
    %v645 = vadd.f32 %v577, %v584
    %v646 = vadd.f32 %v578, %v584
    %v647 = vadd.f32 %v579, %v584
    %v648 = vadd.f32 %v580, %v584
    %v649 = vadd.f32 %v581, %v584
    %v650 = vmax.f32 %v586, 0.0
    %v651 = vmax.f32 %v587, 0.0
    %v652 = vmax.f32 %v588, 0.0
    %v653 = vmax.f32 %v589, 0.0
    %v654 = vmax.f32 %v590, 0.0
    %v655 = vmax.f32 %v591, 0.0
    %v656 = vmax.f32 %v592, 0.0
    %v657 = vmax.f32 %v593, 0.0
    %v658 = vmax.f32 %v594, 0.0
    %v659 = vmax.f32 %v595, 0.0
    %v660 = vmax.f32 %v596, 0.0
    %v661 = vmax.f32 %v597, 0.0
    %v662 = vmax.f32 %v598, 0.0
    %v663 = vmax.f32 %v599, 0.0
    %v664 = vmax.f32 %v600, 0.0
    %v665 = vmax.f32 %v601, 0.0
    %v666 = vmax.f32 %v602, 0.0
    %v667 = vmax.f32 %v603, 0.0
    %v668 = vmax.f32 %v604, 0.0
    %v669 = vmax.f32 %v605, 0.0
    %v670 = vmax.f32 %v606, 0.0
    %v671 = vmax.f32 %v607, 0.0
    %v672 = vmax.f32 %v608, 0.0
    %v673 = vmax.f32 %v609, 0.0
    %v674 = vmax.f32 %v610, 0.0
    %v675 = vmax.f32 %v611, 0.0
    %v676 = vmax.f32 %v612, 0.0
    %v677 = vmax.f32 %v613, 0.0
    %v678 = vmax.f32 %v614, 0.0
    %v679 = vmax.f32 %v615, 0.0
    %v680 = vmax.f32 %v616, 0.0
    %v681 = vmax.f32 %v617, 0.0
    %v682 = vmax.f32 %v618, 0.0
    %v683 = vmax.f32 %v619, 0.0
    %v684 = vmax.f32 %v620, 0.0
    %v685 = vmax.f32 %v621, 0.0
    %v686 = vmax.f32 %v622, 0.0
    %v687 = vmax.f32 %v623, 0.0
    %v688 = vmax.f32 %v624, 0.0
    %v689 = vmax.f32 %v625, 0.0
    %v690 = vmax.f32 %v626, 0.0
    %v691 = vmax.f32 %v627, 0.0
    %v692 = vmax.f32 %v628, 0.0
    %v693 = vmax.f32 %v629, 0.0
    %v694 = vmax.f32 %v630, 0.0
    %v695 = vmax.f32 %v631, 0.0
    %v696 = vmax.f32 %v632, 0.0
    %v697 = vmax.f32 %v633, 0.0
    %v698 = vmax.f32 %v634, 0.0
    %v699 = vmax.f32 %v635, 0.0
    %v700 = vmax.f32 %v636, 0.0
    %v701 = vmax.f32 %v637, 0.0
    %v702 = vmax.f32 %v638, 0.0
    %v703 = vmax.f32 %v639, 0.0
    %v704 = vmax.f32 %v640, 0.0
    %v705 = vmax.f32 %v641, 0.0
    %v706 = vmax.f32 %v642, 0.0
    %v707 = vmax.f32 %v643, 0.0
    %v708 = vmax.f32 %v644, 0.0
    %v709 = vmax.f32 %v645, 0.0
    %v710 = vmax.f32 %v646, 0.0
    %v711 = vmax.f32 %v647, 0.0
    %v712 = vmax.f32 %v648, 0.0
    %v713 = vmax.f32 %v649, 0.0
    %v714 = vpack.c.bf16 %v650, %v650
    %v715 = vpack.c.bf16 %v651, %v651
    %v716 = vpack.c.bf16 %v652, %v652
    %v717 = vpack.c.bf16 %v653, %v653
    %v718 = vpack.c.bf16 %v654, %v654
    %v719 = vpack.c.bf16 %v655, %v655
    %v720 = vpack.c.bf16 %v656, %v656
    %v721 = vpack.c.bf16 %v657, %v657
    %v722 = vpack.c.bf16 %v658, %v658
    %v723 = vpack.c.bf16 %v659, %v659
    %v724 = vpack.c.bf16 %v660, %v660
    %v725 = vpack.c.bf16 %v661, %v661
    %v726 = vpack.c.bf16 %v662, %v662
    %v727 = vpack.c.bf16 %v663, %v663
    %v728 = vpack.c.bf16 %v664, %v664
    %v729 = vpack.c.bf16 %v665, %v665
    %v730 = vpack.c.bf16 %v666, %v666
    %v731 = vpack.c.bf16 %v667, %v667
    %v732 = vpack.c.bf16 %v668, %v668
    %v733 = vpack.c.bf16 %v669, %v669
    %v734 = vpack.c.bf16 %v670, %v670
    %v735 = vpack.c.bf16 %v671, %v671
    %v736 = vpack.c.bf16 %v672, %v672
    %v737 = vpack.c.bf16 %v673, %v673
    %v738 = vpack.c.bf16 %v674, %v674
    %v739 = vpack.c.bf16 %v675, %v675
    %v740 = vpack.c.bf16 %v676, %v676
    %v741 = vpack.c.bf16 %v677, %v677
    %v742 = vpack.c.bf16 %v678, %v678
    %v743 = vpack.c.bf16 %v679, %v679
    %v744 = vpack.c.bf16 %v680, %v680
    %v745 = vpack.c.bf16 %v681, %v681
    %v746 = vpack.c.bf16 %v682, %v682
    %v747 = vpack.c.bf16 %v683, %v683
    %v748 = vpack.c.bf16 %v684, %v684
    %v749 = vpack.c.bf16 %v685, %v685
    %v750 = vpack.c.bf16 %v686, %v686
    %v751 = vpack.c.bf16 %v687, %v687
    %v752 = vpack.c.bf16 %v688, %v688
    %v753 = vpack.c.bf16 %v689, %v689
    %v754 = vpack.c.bf16 %v690, %v690
    %v755 = vpack.c.bf16 %v691, %v691
    %v756 = vpack.c.bf16 %v692, %v692
    %v757 = vpack.c.bf16 %v693, %v693
    %v758 = vpack.c.bf16 %v694, %v694
    %v759 = vpack.c.bf16 %v695, %v695
    %v760 = vpack.c.bf16 %v696, %v696
    %v761 = vpack.c.bf16 %v697, %v697
    %v762 = vpack.c.bf16 %v698, %v698
    %v763 = vpack.c.bf16 %v699, %v699
    %v764 = vpack.c.bf16 %v700, %v700
    %v765 = vpack.c.bf16 %v701, %v701
    %v766 = vpack.c.bf16 %v702, %v702
    %v767 = vpack.c.bf16 %v703, %v703
    %v768 = vpack.c.bf16 %v704, %v704
    %v769 = vpack.c.bf16 %v705, %v705
    %v770 = vpack.c.bf16 %v706, %v706
    %v771 = vpack.c.bf16 %v707, %v707
    %v772 = vpack.c.bf16 %v708, %v708
    %v773 = vpack.c.bf16 %v709, %v709
    %v774 = vpack.c.bf16 %v710, %v710
    %v775 = vpack.c.bf16 %v711, %v711
    %v776 = vpack.c.bf16 %v712, %v712
    %v777 = vpack.c.bf16 %v713, %v713
    %778 = vst [vmem:[#allocation2] sm:$0xf] %v714
    %779 = vst [vmem:[#allocation2 + $0x4] sm:$0xf] %v715
    %780 = vst [vmem:[#allocation2 + $0x8] sm:$0xf] %v716
    %781 = vst [vmem:[#allocation2 + $0xc] sm:$0xf] %v717
    %782 = vst [vmem:[#allocation2 + $0x10] sm:$0xf] %v718
    %783 = vst [vmem:[#allocation2 + $0x14] sm:$0xf] %v719
    %784 = vst [vmem:[#allocation2 + $0x18] sm:$0xf] %v720
    %785 = vst [vmem:[#allocation2 + $0x1c] sm:$0xf] %v721
    %786 = vst [vmem:[#allocation2 + $0x20] sm:$0xf] %v722
    %787 = vst [vmem:[#allocation2 + $0x24] sm:$0xf] %v723
    %788 = vst [vmem:[#allocation2 + $0x28] sm:$0xf] %v724
    %789 = vst [vmem:[#allocation2 + $0x2c] sm:$0xf] %v725
    %790 = vst [vmem:[#allocation2 + $0x30] sm:$0xf] %v726
    %791 = vst [vmem:[#allocation2 + $0x34] sm:$0xf] %v727
    %792 = vst [vmem:[#allocation2 + $0x38] sm:$0xf] %v728
    %793 = vst [vmem:[#allocation2 + $0x3c] sm:$0xf] %v729
    %794 = vst [vmem:[#allocation2 + $0x40] sm:$0xf] %v730
    %795 = vst [vmem:[#allocation2 + $0x44] sm:$0xf] %v731
    %796 = vst [vmem:[#allocation2 + $0x48] sm:$0xf] %v732
    %797 = vst [vmem:[#allocation2 + $0x4c] sm:$0xf] %v733
    %798 = vst [vmem:[#allocation2 + $0x50] sm:$0xf] %v734
    %799 = vst [vmem:[#allocation2 + $0x54] sm:$0xf] %v735
    %800 = vst [vmem:[#allocation2 + $0x58] sm:$0xf] %v736
    %801 = vst [vmem:[#allocation2 + $0x5c] sm:$0xf] %v737
    %802 = vst [vmem:[#allocation2 + $0x60] sm:$0xf] %v738
    %803 = vst [vmem:[#allocation2 + $0x64] sm:$0xf] %v739
    %804 = vst [vmem:[#allocation2 + $0x68] sm:$0xf] %v740
    %805 = vst [vmem:[#allocation2 + $0x6c] sm:$0xf] %v741
    %806 = vst [vmem:[#allocation2 + $0x70] sm:$0xf] %v742
    %807 = vst [vmem:[#allocation2 + $0x74] sm:$0xf] %v743
    %808 = vst [vmem:[#allocation2 + $0x78] sm:$0xf] %v744
    %809 = vst [vmem:[#allocation2 + $0x7c] sm:$0xf] %v745
    %810 = vst [vmem:[#allocation2 + $0x80] sm:$0xf] %v746
    %811 = vst [vmem:[#allocation2 + $0x84] sm:$0xf] %v747
    %812 = vst [vmem:[#allocation2 + $0x88] sm:$0xf] %v748
    %813 = vst [vmem:[#allocation2 + $0x8c] sm:$0xf] %v749
    %814 = vst [vmem:[#allocation2 + $0x90] sm:$0xf] %v750
    %815 = vst [vmem:[#allocation2 + $0x94] sm:$0xf] %v751
    %816 = vst [vmem:[#allocation2 + $0x98] sm:$0xf] %v752
    %817 = vst [vmem:[#allocation2 + $0x9c] sm:$0xf] %v753
    %818 = vst [vmem:[#allocation2 + $0xa0] sm:$0xf] %v754
    %819 = vst [vmem:[#allocation2 + $0xa4] sm:$0xf] %v755
    %820 = vst [vmem:[#allocation2 + $0xa8] sm:$0xf] %v756
    %821 = vst [vmem:[#allocation2 + $0xac] sm:$0xf] %v757
    %822 = vst [vmem:[#allocation2 + $0xb0] sm:$0xf] %v758
    %823 = vst [vmem:[#allocation2 + $0xb4] sm:$0xf] %v759
    %824 = vst [vmem:[#allocation2 + $0xb8] sm:$0xf] %v760
    %825 = vst [vmem:[#allocation2 + $0xbc] sm:$0xf] %v761
    %826 = vst [vmem:[#allocation2 + $0xc0] sm:$0xf] %v762
    %827 = vst [vmem:[#allocation2 + $0xc4] sm:$0xf] %v763
    %828 = vst [vmem:[#allocation2 + $0xc8] sm:$0xf] %v764
    %829 = vst [vmem:[#allocation2 + $0xcc] sm:$0xf] %v765
    %830 = vst [vmem:[#allocation2 + $0xd0] sm:$0xf] %v766
    %831 = vst [vmem:[#allocation2 + $0xd4] sm:$0xf] %v767
    %832 = vst [vmem:[#allocation2 + $0xd8] sm:$0xf] %v768
    %833 = vst [vmem:[#allocation2 + $0xdc] sm:$0xf] %v769
    %834 = vst [vmem:[#allocation2 + $0xe0] sm:$0xf] %v770
    %835 = vst [vmem:[#allocation2 + $0xe4] sm:$0xf] %v771
    %836 = vst [vmem:[#allocation2 + $0xe8] sm:$0xf] %v772
    %837 = vst [vmem:[#allocation2 + $0xec] sm:$0xf] %v773
    %838 = vst [vmem:[#allocation2 + $0xf0] sm:$0xf] %v774
    %839 = vst [vmem:[#allocation2 + $0xf4] sm:$0xf] %v775
    %840 = vst [vmem:[#allocation2 + $0xf8] sm:$0xf] %v776
    %841 = vst [vmem:[#allocation2 + $0xfc] sm:$0xf] %v777
    // Predicated region
    $region18: #{tpu_custom_call.1} parent=1 // pred_check
      _
    $region19: #{tpu_custom_call.1} parent=1 // pred_check_branch
      %843 = sbr.rel (0) target = $region21
    $region20: #{tpu_custom_call.1} parent=1 // pred_region
      %845 = vsyncadd [#allocation3], 0
      %s846 = sshll.u32 [#allocation2], 4
      %s847 = int_to_ptr.vmem [resolvable:$true] %s846
      %s848 = sshll.u32 %s4, 4
      %s849 = int_to_ptr.hbm [resolvable:$true] %s848
      %854 = dma.vmem_to_hbm [thread:$0]  %s847, 4096, %s849, [#allocation3], 64, 64, 4
    $region21: #{tpu_custom_call.1} parent=1 // pred_fallthru
      _
    // Predicated region
    $region22: #{tpu_custom_call.1} parent=1 // pred_check
      _
    $region23: #{tpu_custom_call.1} parent=1 // pred_check_branch
      %856 = sbr.rel (0) target = $region25
    $region24: #{tpu_custom_call.1} parent=1 // pred_region
      %858 = dma.done [#allocation3], 4096
    $region25: #{tpu_custom_call.1} parent=1 // pred_fallthru
      _
    %859 = vsyncpa [#allocation3], 1

</llo_original>
